<compile_context>
chip_gen: v7x
topology: tpu7x:2x2x1
jax: 0.10.0
libtpu: 0.0.40
codegen_flags: <defaults>
</compile_context>

<pallas_src>
import jax
import jax.numpy as jnp
from jax import lax
from jax.experimental import pallas as pl
from jax.experimental.pallas import tpu as pltpu


def mlp1_kernel(x_ref, w_ref, b_ref, bits_ref, o_ref):
    # Linear: y = x @ W^T + b, contracting over IN directly on the (OUT, IN)
    # weight tile (MXU handles the transposed operand natively).
    y = lax.dot_general(
        x_ref[...], w_ref[...],
        dimension_numbers=(((1,), (1,)), ((), ())),
        preferred_element_type=jnp.float32,
    )
    y = y + b_ref[...]  # (1, tn) broadcasts over the batch-tile rows

    # Mish: y * tanh(softplus(y)) with one EUP transcendental.
    #   t = exp(y)  (clamped so t*(t+2) stays finite in f32; result -> y there)
    #   tanh(softplus(y)) = t*(t+2) / (t*(t+2) + 2)
    t = jnp.exp(jnp.minimum(y, 20.0))
    u = t * (t + 2.0)
    y = y * (u / (u + 2.0))

    # Dropout p=0.5 (training=True): keep with prob 0.5, scale kept by 2.
    keep = bits_ref[...] < jnp.uint32(0x80000000)
    y = y * jnp.where(keep, 2.0, 0.0)

    o_ref[...] = y.astype(o_ref.dtype)


def _pick_tile(dim, candidates):
    """Largest MXU-friendly tile that evenly divides dim, else the full dim."""
    for c in candidates:
        if dim >= c and dim % c == 0:
            return c
    return dim


def mlp1_forward(x, weight, bias, key):
    """x: (B, IN) f32. weight: (OUT, IN) f32 (PyTorch layout). bias: (OUT,)."""
    B, IN = x.shape
    OUT = weight.shape[0]

    # Tile sizes: batch rows in multiples of 128/256 when possible, output
    # lanes >= 128 (lane-dense stores). IN stays un-tiled (small K).
    tm = _pick_tile(B, (256, 128))
    tn = _pick_tile(OUT, (512, 256, 128))
    grid = (pl.cdiv(B, tm), pl.cdiv(OUT, tn))

    # Bernoulli(0.5) bits for dropout, generated once per call.
    bits = jax.random.bits(key, (B, OUT), dtype=jnp.uint32)
    b2 = bias.reshape(1, OUT)

    return pl.pallas_call(
        mlp1_kernel,
        out_shape=jax.ShapeDtypeStruct((B, OUT), jnp.float32),
        grid=grid,
        in_specs=[
            pl.BlockSpec((tm, IN), lambda i, j: (i, 0)),   # x tile
            pl.BlockSpec((tn, IN), lambda i, j: (j, 0)),   # W tile (OUT, IN) layout
            pl.BlockSpec((1, tn), lambda i, j: (0, j)),    # bias tile
            pl.BlockSpec((tm, tn), lambda i, j: (i, j)),   # dropout bits tile
        ],
        out_specs=pl.BlockSpec((tm, tn), lambda i, j: (i, j)),
        compiler_params=pltpu.CompilerParams(
            dimension_semantics=("parallel", "parallel"),
        ),
    )(x, weight, b2, bits)


if __name__ == "__main__":
    key = jax.random.PRNGKey(0)
    kx, kw, kb, kd = jax.random.split(key, 4)

    B, IN, OUT = 8, 32, 128  # LazyLinear infers IN from x; output_dim = OUT

    x = jax.random.normal(kx, (B, IN), dtype=jnp.float32)
    # Deterministic "LazyLinear" parameters (PyTorch layout: weight (OUT, IN)).
    bound = 1.0 / (IN ** 0.5)
    weight = jax.random.uniform(kw, (OUT, IN), minval=-bound, maxval=bound,
                                dtype=jnp.float32)
    bias = jax.random.uniform(kb, (OUT,), minval=-bound, maxval=bound,
                              dtype=jnp.float32)

    out = mlp1_forward(x, weight, bias, kd)
    jax.block_until_ready(out)

    assert out.shape == (B, OUT)
    assert out.dtype == jnp.float32
    assert bool(jnp.all(jnp.isfinite(out)))
    print("KERNEL_OK")
</pallas_src>

<mosaic_0001>
module attributes {stable_mosaic.version = 11 : i64} {
  func.func @mlp1_kernel(%arg0: i32, %arg1: i32, %arg2: memref<8x32xf32, #tpu.memory_space<vmem>>, %arg3: memref<128x32xf32, #tpu.memory_space<vmem>>, %arg4: memref<1x128xf32, #tpu.memory_space<vmem>>, %arg5: memref<8x128xi32, #tpu.memory_space<vmem>>, %arg6: memref<8x128xf32, #tpu.memory_space<vmem>>) attributes {dimension_semantics = [#tpu.dimension_semantics<parallel>, #tpu.dimension_semantics<parallel>], iteration_bounds = array<i64: 1, 1>, scalar_prefetch = 0 : i64, scratch_operands = 0 : i64, tpu.core_type = #tpu.core_type<tc>, window_params = [{transform_indices = @transform_0, window_bounds = array<i64: 8, 32>}, {transform_indices = @transform_1, window_bounds = array<i64: 128, 32>}, {transform_indices = @transform_2, window_bounds = array<i64: 1, 128>}, {transform_indices = @transform_3, window_bounds = array<i64: 8, 128>}, {transform_indices = @transform_4, window_bounds = array<i64: 8, 128>}]} {
    %c0 = arith.constant 0 : index
    %c0_0 = arith.constant 0 : index
    %0 = vector.load %arg2[%c0, %c0_0] : memref<8x32xf32, #tpu.memory_space<vmem>>, vector<8x32xf32>
    %c0_1 = arith.constant 0 : index
    %c0_2 = arith.constant 0 : index
    %1 = vector.load %arg3[%c0_1, %c0_2] : memref<128x32xf32, #tpu.memory_space<vmem>>, vector<128x32xf32>
    %cst = arith.constant dense<0.000000e+00> : vector<8x128xf32>
    %2 = tpu.matmul %0, %1, %cst {dimension_numbers = #tpu.dot_dimension_numbers<[1], [1], [0], [0], [0, 0, 1, 0], [], []>} : vector<8x32xf32>, vector<128x32xf32>, vector<8x128xf32> -> vector<8x128xf32>
    %c0_3 = arith.constant 0 : index
    %c0_4 = arith.constant 0 : index
    %3 = vector.load %arg4[%c0_3, %c0_4] : memref<1x128xf32, #tpu.memory_space<vmem>>, vector<1x128xf32>
    %4 = vector.broadcast %3 : vector<1x128xf32> to vector<8x128xf32>
    %5 = arith.addf %2, %4 : vector<8x128xf32>
    %cst_5 = arith.constant 2.000000e+01 : f32
    %6 = vector.broadcast %cst_5 : f32 to vector<8x128xf32>
    %7 = arith.minimumf %5, %6 : vector<8x128xf32>
    %8 = math.exp %7 : vector<8x128xf32>
    %cst_6 = arith.constant 2.000000e+00 : f32
    %9 = vector.broadcast %cst_6 : f32 to vector<8x128xf32>
    %10 = arith.addf %8, %9 : vector<8x128xf32>
    %11 = arith.mulf %8, %10 : vector<8x128xf32>
    %cst_7 = arith.constant 2.000000e+00 : f32
    %12 = vector.broadcast %cst_7 : f32 to vector<8x128xf32>
    %13 = arith.addf %11, %12 : vector<8x128xf32>
    %14 = arith.divf %11, %13 : vector<8x128xf32>
    %15 = arith.mulf %5, %14 : vector<8x128xf32>
    %c0_8 = arith.constant 0 : index
    %c0_9 = arith.constant 0 : index
    %16 = vector.load %arg5[%c0_8, %c0_9] : memref<8x128xi32, #tpu.memory_space<vmem>>, vector<8x128xi32>
    %c-2147483648_i32 = arith.constant -2147483648 : i32
    %17 = vector.broadcast %c-2147483648_i32 : i32 to vector<8x128xi32>
    %18 = arith.cmpi ult, %16, %17 : vector<8x128xi32>
    %cst_10 = arith.constant 2.000000e+00 : f32
    %cst_11 = arith.constant 0.000000e+00 : f32
    %19 = vector.broadcast %cst_10 : f32 to vector<8x128xf32>
    %20 = vector.broadcast %cst_11 : f32 to vector<8x128xf32>
    %21 = arith.select %18, %19, %20 : vector<8x128xi1>, vector<8x128xf32>
    %22 = arith.mulf %15, %21 : vector<8x128xf32>
    %c0_12 = arith.constant 0 : index
    %c0_13 = arith.constant 0 : index
    %23 = vector.load %arg6[%c0_12, %c0_13] : memref<8x128xf32, #tpu.memory_space<vmem>>, vector<8x128xf32>
    tpu.vector_store %arg6[%c0_12, %c0_13], %22 {strides = array<i32>} : memref<8x128xf32, #tpu.memory_space<vmem>>, vector<8x128xf32>,
    return
  }
  func.func @transform_0(%arg0: i32, %arg1: i32) -> (i32, i32) {
    %c0_i32 = arith.constant 0 : i32
    %c0_i32_0 = arith.constant 0 : i32
    return %arg0, %c0_i32 : i32, i32
  }
  func.func @transform_1(%arg0: i32, %arg1: i32) -> (i32, i32) {
    %c0_i32 = arith.constant 0 : i32
    %c0_i32_0 = arith.constant 0 : i32
    return %arg1, %c0_i32 : i32, i32
  }
  func.func @transform_2(%arg0: i32, %arg1: i32) -> (i32, i32) {
    %c0_i32 = arith.constant 0 : i32
    %c0_i32_0 = arith.constant 0 : i32
    return %c0_i32, %arg1 : i32, i32
  }
  func.func @transform_3(%arg0: i32, %arg1: i32) -> (i32, i32) {
    %c0_i32 = arith.constant 0 : i32
    return %arg0, %arg1 : i32, i32
  }
  func.func @transform_4(%arg0: i32, %arg1: i32) -> (i32, i32) {
    %c0_i32 = arith.constant 0 : i32
    return %arg0, %arg1 : i32, i32
  }
}

</mosaic_0001>

<llo_original>
// kernel: tpu_custom_call.1
$region0: #{tpu_custom_call.1}
  #allocation0 [shape = 'u32[]', space=smem, size = 0x4, offset = 0x4, fixed_abs, tag = 'smem constant byte address 0x4 - core index']
  #allocation1 [shape = 'u32[144,128]{1,0:T(1,128)}', space=vmem, size = 0x12000, scoped, tag = 'internal scratch']
  %s0 = inlined_call_operand.vmem [shape: f32[8,32], index: 0, kind: input, shape index: {}]
  %s1 = inlined_call_operand.vmem [shape: f32[128,32], index: 1, kind: input, shape index: {}]
  %s2 = inlined_call_operand.vmem [shape: f32[1,128], index: 2, kind: input, shape index: {}]
  %s3 = inlined_call_operand.vmem [shape: u32[8,128], index: 3, kind: input, shape index: {}]
  %s4 = inlined_call_operand.hbm [shape: f32[8,128], index: 4, kind: output, shape index: {}]
  %s5 = sld [smem:[#allocation0]]
  $region26: #{tpu_custom_call.1} parent=0
    _
  %s7 = ssub.s32 1, %s5
  %s8 = scalar_select 0, %s7, %s5
  $region1: #{tpu_custom_call.1} parent=0
    #allocation2 [shape = 'u8[4096]{0}', space=vmem, size = 0x1000, scoped, tag = 'output window, operand 0, single buffered']
    #allocation3 [shape = 's32[1]{0}', space=sflag, size = 0x4, scoped, tag = 'scoped memory for tpu_custom_call.1']
    %9 = vsyncpa [#allocation3], 0
    // Predicated region
    $region2: #{tpu_custom_call.1} parent=1 // pred_check
      _
    $region3: #{tpu_custom_call.1} parent=1 // pred_check_branch
      %11 = sbr.rel (0) target = $region5
    $region4: #{tpu_custom_call.1} parent=1 // pred_region
      _
    $region5: #{tpu_custom_call.1} parent=1 // pred_fallthru
      _
    // Predicated region
    $region6: #{tpu_custom_call.1} parent=1 // pred_check
      _
    $region7: #{tpu_custom_call.1} parent=1 // pred_check_branch
      %13 = sbr.rel (0) target = $region9
    $region8: #{tpu_custom_call.1} parent=1 // pred_region
      _
    $region9: #{tpu_custom_call.1} parent=1 // pred_fallthru
      _
    // Predicated region
    $region10: #{tpu_custom_call.1} parent=1 // pred_check
      _
    $region11: #{tpu_custom_call.1} parent=1 // pred_check_branch
      %15 = sbr.rel (0) target = $region13
    $region12: #{tpu_custom_call.1} parent=1 // pred_region
      _
    $region13: #{tpu_custom_call.1} parent=1 // pred_fallthru
      _
    // Predicated region
    $region14: #{tpu_custom_call.1} parent=1 // pred_check
      _
    $region15: #{tpu_custom_call.1} parent=1 // pred_check_branch
      %17 = sbr.rel (0) target = $region17
    $region16: #{tpu_custom_call.1} parent=1 // pred_region
      _
    $region17: #{tpu_custom_call.1} parent=1 // pred_fallthru
      _
    %v18 = vld [vmem:[%s0] sm:$0xff]
    %v19 = vld [vmem:[%s1] sm:$0xff]
    %v20 = vld [vmem:[%s1 + $0x8] sm:$0xff]
    %v21 = vld [vmem:[%s1 + $0x10] sm:$0xff]
    %v22 = vld [vmem:[%s1 + $0x18] sm:$0xff]
    %v23 = vld [vmem:[%s1 + $0x20] sm:$0xff]
    %v24 = vld [vmem:[%s1 + $0x28] sm:$0xff]
    %v25 = vld [vmem:[%s1 + $0x30] sm:$0xff]
    %v26 = vld [vmem:[%s1 + $0x38] sm:$0xff]
    %v27 = vld [vmem:[%s1 + $0x40] sm:$0xff]
    %v28 = vld [vmem:[%s1 + $0x48] sm:$0xff]
    %v29 = vld [vmem:[%s1 + $0x50] sm:$0xff]
    %v30 = vld [vmem:[%s1 + $0x58] sm:$0xff]
    %v31 = vld [vmem:[%s1 + $0x60] sm:$0xff]
    %v32 = vld [vmem:[%s1 + $0x68] sm:$0xff]
    %v33 = vld [vmem:[%s1 + $0x70] sm:$0xff]
    %v34 = vld [vmem:[%s1 + $0x78] sm:$0xff]
    %v35 = vld [vmem:[%s2] sm:$0x1]
    %v37 = vlaneseq
    %v38 = vshrl.u32 %v37, 7
    %v39 = vsub.s32 0, %v38
    %v40 = vrot.slane %v35, %v39
    %vm42 = vcmask 261120
    %v44 = vsel %vm42, %v18, 0
    %v47 = vsel %vm42, %v19, 0
    %v50 = vsel %vm42, %v20, 0
    %v53 = vsel %vm42, %v21, 0
    %v56 = vsel %vm42, %v22, 0
    %v59 = vsel %vm42, %v23, 0
    %v62 = vsel %vm42, %v24, 0
    %v65 = vsel %vm42, %v25, 0
    %v68 = vsel %vm42, %v26, 0
    %v71 = vsel %vm42, %v27, 0
    %v74 = vsel %vm42, %v28, 0
    %v77 = vsel %vm42, %v29, 0
    %v80 = vsel %vm42, %v30, 0
    %v83 = vsel %vm42, %v31, 0
    %v86 = vsel %vm42, %v32, 0
    %v89 = vsel %vm42, %v33, 0
    %v92 = vsel %vm42, %v34, 0
    %94 = vmatprep.subr.mxu0 0.0
    %95 = vmatpush1.xpose.msra.mxu0 %v47
    %96 = vmatprep.subr.mxu0 0.0
    %97 = vmatpush1.xpose.msra.mxu0 %v50
    %98 = vmatprep.subr.mxu0 0.0
    %99 = vmatpush1.xpose.msra.mxu0 %v53
    %100 = vmatprep.subr.mxu0 0.0
    %101 = vmatpush1.xpose.msra.mxu0 %v56
    %102 = vmatprep.subr.mxu0 0.0
    %103 = vmatpush1.xpose.msra.mxu0 %v59
    %104 = vmatprep.subr.mxu0 0.0
    %105 = vmatpush1.xpose.msra.mxu0 %v62
    %106 = vmatprep.subr.mxu0 0.0
    %107 = vmatpush1.xpose.msra.mxu0 %v65
    %108 = vmatprep.subr.mxu0 0.0
    %109 = vmatpush1.xpose.msra.mxu0 %v68
    %110 = vmatprep.subr.mxu0 0.0
    %111 = vmatpush1.xpose.msra.mxu0 %v71
    %112 = vmatprep.subr.mxu0 0.0
    %113 = vmatpush1.xpose.msra.mxu0 %v74
    %114 = vmatprep.subr.mxu0 0.0
    %115 = vmatpush1.xpose.msra.mxu0 %v77
    %116 = vmatprep.subr.mxu0 0.0
    %117 = vmatpush1.xpose.msra.mxu0 %v80
    %118 = vmatprep.subr.mxu0 0.0
    %119 = vmatpush1.xpose.msra.mxu0 %v83
    %120 = vmatprep.subr.mxu0 0.0
    %121 = vmatpush1.xpose.msra.mxu0 %v86
    %122 = vmatprep.subr.mxu0 0.0
    %123 = vmatpush1.xpose.msra.mxu0 %v89
    %124 = vmatprep.subr.mxu0 0.0
    %125 = vmatpush1.xpose.msra.mxu0 %v92
    %126 = vmatprep.subr.mxu0 0.0
    %127 = vmatpush1.xpose.msra.mxu0 0.0
    %128 = vmatprep.subr.mxu0 0.0
    %129 = vmatpush1.xpose.msra.mxu0 0.0
    %130 = vmatprep.subr.mxu0 0.0
    %131 = vmatpush1.xpose.msra.mxu0 0.0
    %132 = vmatprep.subr.mxu0 0.0
    %133 = vmatpush1.xpose.msra.mxu0 0.0
    %134 = vmatprep.subr.mxu0 0.0
    %135 = vmatpush1.xpose.msra.mxu0 0.0
    %136 = vmatprep.subr.mxu0 0.0
    %137 = vmatpush1.xpose.msra.mxu0 0.0
    %138 = vmatprep.subr.mxu0 0.0
    %139 = vmatpush1.xpose.msra.mxu0 0.0
    %140 = vmatprep.subr.mxu0 0.0
    %141 = vmatpush1.xpose.msra.mxu0 0.0
    %142 = vmatprep.subr.mxu0 0.0
    %143 = vmatpush1.xpose.msra.mxu0 0.0
    %144 = vmatprep.subr.mxu0 0.0
    %145 = vmatpush1.xpose.msra.mxu0 0.0
    %146 = vmatprep.subr.mxu0 0.0
    %147 = vmatpush1.xpose.msra.mxu0 0.0
    %148 = vmatprep.subr.mxu0 0.0
    %149 = vmatpush1.xpose.msra.mxu0 0.0
    %150 = vmatprep.subr.mxu0 0.0
    %151 = vmatpush1.xpose.msra.mxu0 0.0
    %152 = vmatprep.subr.mxu0 0.0
    %153 = vmatpush1.xpose.msra.mxu0 0.0
    %154 = vmatprep.subr.mxu0 0.0
    %155 = vmatpush1.xpose.msra.mxu0 0.0
    %156 = vmatprep.subr.mxu0 0.0
    %157 = vmatpush1.xpose.msra.mxu0 0.0
    %158 = vmatprep.mubr.f32.mxu0 0.0
    %159 = vmatmul.mubr.f32.gmra.mrb[0].mxu0 %v44
    %v160 = vpop.f32.mrb[0].mxu0
    %v161 = vadd.f32 %v40, %v160
    %v162 = vpop.f32.mrb[0].mxu0
    %163 = vdwg.mxu0
    %v164 = vmin.f32 %v161, 20.0
    %v165 = vmul.f32 %v164, 1.442695
    %v166 = vpow.pop %v165
    %v167 = vadd.f32 %v166, 2.0
    %v168 = vmul.f32 %v166, %v167
    %v169 = vadd.f32 %v168, 2.0
    %v170 = vrcp.pop %v169
    %v171 = vmul.f32 %v168, %v170
    %v172 = vmul.f32 %v161, %v171
    %v173 = vld [vmem:[%s3] sm:$0xff]
    %vm174 = vcmp.lt.u32.totalorder %v173, 2147483648
    %v175 = vsel %vm174, 2.0, 0.0
    %v176 = vmul.f32 %v172, %v175
    %177 = vst [vmem:[#allocation2] sm:$0xff] %v176
    // Predicated region
    $region18: #{tpu_custom_call.1} parent=1 // pred_check
      _
    $region19: #{tpu_custom_call.1} parent=1 // pred_check_branch
      %179 = sbr.rel (0) target = $region21
    $region20: #{tpu_custom_call.1} parent=1 // pred_region
      %s181 = ssub.s32 128, 128
      %182 = vsyncadd [#allocation3], %s181
      %s184 = sshll.u32 [#allocation2], 4
      %s185 = int_to_ptr.vmem [resolvable:$true] %s184
      %187 = dma.vmem_to_hbm [thread:$0]  %s185, 128, %s4, [#allocation3]
    $region21: #{tpu_custom_call.1} parent=1 // pred_fallthru
      _
    // Predicated region
    $region22: #{tpu_custom_call.1} parent=1 // pred_check
      _
    $region23: #{tpu_custom_call.1} parent=1 // pred_check_branch
      %189 = sbr.rel (0) target = $region25
    $region24: #{tpu_custom_call.1} parent=1 // pred_region
      %190 = dma.done [#allocation3], 128
    $region25: #{tpu_custom_call.1} parent=1 // pred_fallthru
      _
    %191 = vsyncpa [#allocation3], 1

</llo_original>
